<compile_context>
chip_gen: v7x
topology: tpu7x:2x2x1
jax: 0.10.0
libtpu: 0.0.40
codegen_flags: <defaults>
</compile_context>

<pallas_src>
import jax
import jax.numpy as jnp
from jax.experimental import pallas as pl
from jax.experimental.pallas import tpu as pltpu


def mlp_kernel(x_ref,
               w1_ref, b1_ref,
               w2_ref, b2_ref,
               w3_ref, b3_ref,
               w4_ref, b4_ref,
               o_ref):
    # Activations are (features, TB): batch on the lane axis.
    h = x_ref[...]                                                  # (4, TB) f32

    # Layer 1: Linear(4 -> 10) + ReLU
    h = jnp.dot(w1_ref[...], h, preferred_element_type=jnp.float32) + b1_ref[...]
    h = jnp.maximum(h, 0.0)

    # Layer 2: Linear(10 -> 8) + ReLU
    h = jnp.dot(w2_ref[...], h, preferred_element_type=jnp.float32) + b2_ref[...]
    h = jnp.maximum(h, 0.0)

    # Layer 3: Linear(8 -> 6) + ReLU
    h = jnp.dot(w3_ref[...], h, preferred_element_type=jnp.float32) + b3_ref[...]
    h = jnp.maximum(h, 0.0)

    # Layer 4: Linear(6 -> 1) + Sigmoid (exp + approx reciprocal -> EUP slot)
    z = jnp.dot(w4_ref[...], h, preferred_element_type=jnp.float32) + b4_ref[...]
    o_ref[...] = pl.reciprocal(1.0 + jnp.exp(-z), approx=True).astype(o_ref.dtype)


def _round_up(n, m):
    return ((n + m - 1) // m) * m


def mlp_forward(x, params, *, block_b=8192):
    """x: (B, 4) float32 (PyTorch layout). params: 4x (w, b), w (out, in), b (out, 1)."""
    (w1, b1), (w2, b2), (w3, b3), (w4, b4) = params
    B = x.shape[0]

    # Lane-aligned batch tile: big tiles amortize per-step overhead; tiny
    # batches just round up to one 128-wide tile.
    TB = min(block_b, _round_up(B, 128))
    B_pad = _round_up(B, TB)
    num_blocks = B_pad // TB

    # Single wrapper-side transpose so the batch becomes the minor (lane) axis.
    xt = jnp.transpose(jnp.pad(x, ((0, B_pad - B), (0, 0))))       # (4, B_pad)

    def full(a):  # whole-array block, VMEM-resident across grid steps
        return pl.BlockSpec(a.shape, lambda i: (0,) * a.ndim)

    out_t = pl.pallas_call(
        mlp_kernel,
        out_shape=jax.ShapeDtypeStruct((1, B_pad), jnp.float32),
        grid=(num_blocks,),
        in_specs=[
            pl.BlockSpec((4, TB), lambda i: (0, i)),               # x^T batch tile
            full(w1), full(b1),
            full(w2), full(b2),
            full(w3), full(b3),
            full(w4), full(b4),
        ],
        out_specs=pl.BlockSpec((1, TB), lambda i: (0, i)),         # lane-dense output
        compiler_params=pltpu.CompilerParams(
            dimension_semantics=("parallel",)),
    )(xt, w1, b1, w2, b2, w3, b3, w4, b4)

    # (1, B_pad) -> (B, 1): pure layout plumbing (singleton dim, no real transpose).
    return out_t[:, :B].reshape(B, 1)


def init_linear(key, fan_in, fan_out):
    # Mimic torch.nn.Linear default init: U(-1/sqrt(fan_in), 1/sqrt(fan_in)).
    # Stored torch-style as (out, in); bias as (out, 1) for feature-major math.
    kw, kb = jax.random.split(key)
    bound = 1.0 / (fan_in ** 0.5)
    w = jax.random.uniform(kw, (fan_out, fan_in), jnp.float32, -bound, bound)
    b = jax.random.uniform(kb, (fan_out, 1), jnp.float32, -bound, bound)
    return w, b


if __name__ == "__main__":
    key = jax.random.PRNGKey(0)
    k_x, k1, k2, k3, k4 = jax.random.split(key, 5)

    B = 8
    x = jax.random.normal(k_x, (B, 4), jnp.float32)

    params = (
        init_linear(k1, 4, 10),
        init_linear(k2, 10, 8),
        init_linear(k3, 8, 6),
        init_linear(k4, 6, 1),
    )

    out = mlp_forward(x, params)
    jax.block_until_ready(out)

    # Pure-JAX reference (batch-major math, identical semantics to the torch module).
    def ref(x, params):
        h = x
        for i, (w, b) in enumerate(params):
            h = h @ w.T + b.T
            h = jnp.maximum(h, 0.0) if i < 3 else jax.nn.sigmoid(h)
        return h

    expected = ref(x, params)
    assert out.shape == (B, 1)
    # Slightly loose tolerance: sigmoid uses the EUP approximate reciprocal.
    assert jnp.allclose(out, expected, atol=1e-3, rtol=1e-3)

    print("KERNEL_OK")
</pallas_src>

<mosaic_0001>
module attributes {stable_mosaic.version = 11 : i64} {
  func.func @mlp_kernel(%arg0: i32, %arg1: memref<4x128xf32, #tpu.memory_space<vmem>>, %arg2: memref<10x4xf32, #tpu.memory_space<vmem>>, %arg3: memref<10x1xf32, #tpu.memory_space<vmem>>, %arg4: memref<8x10xf32, #tpu.memory_space<vmem>>, %arg5: memref<8x1xf32, #tpu.memory_space<vmem>>, %arg6: memref<6x8xf32, #tpu.memory_space<vmem>>, %arg7: memref<6x1xf32, #tpu.memory_space<vmem>>, %arg8: memref<1x6xf32, #tpu.memory_space<vmem>>, %arg9: memref<1x1xf32, #tpu.memory_space<vmem>>, %arg10: memref<1x128xf32, #tpu.memory_space<vmem>>) attributes {dimension_semantics = [#tpu.dimension_semantics<parallel>], iteration_bounds = array<i64: 1>, scalar_prefetch = 0 : i64, scratch_operands = 0 : i64, tpu.core_type = #tpu.core_type<tc>, window_params = [{transform_indices = @transform_0, window_bounds = array<i64: 4, 128>}, {pipeline_mode = #tpu.pipeline_mode<synchronous>, transform_indices = @transform_1, window_bounds = array<i64: 10, 4>}, {pipeline_mode = #tpu.pipeline_mode<synchronous>, transform_indices = @transform_2, window_bounds = array<i64: 10, 1>}, {pipeline_mode = #tpu.pipeline_mode<synchronous>, transform_indices = @transform_3, window_bounds = array<i64: 8, 10>}, {pipeline_mode = #tpu.pipeline_mode<synchronous>, transform_indices = @transform_4, window_bounds = array<i64: 8, 1>}, {pipeline_mode = #tpu.pipeline_mode<synchronous>, transform_indices = @transform_5, window_bounds = array<i64: 6, 8>}, {pipeline_mode = #tpu.pipeline_mode<synchronous>, transform_indices = @transform_6, window_bounds = array<i64: 6, 1>}, {pipeline_mode = #tpu.pipeline_mode<synchronous>, transform_indices = @transform_7, window_bounds = array<i64: 1, 6>}, {pipeline_mode = #tpu.pipeline_mode<synchronous>, transform_indices = @transform_8, window_bounds = array<i64: 1, 1>}, {transform_indices = @transform_9, window_bounds = array<i64: 1, 128>}]} {
    %c0 = arith.constant 0 : index
    %c0_0 = arith.constant 0 : index
    %0 = vector.load %arg1[%c0, %c0_0] : memref<4x128xf32, #tpu.memory_space<vmem>>, vector<4x128xf32>
    %c0_1 = arith.constant 0 : index
    %c0_2 = arith.constant 0 : index
    %1 = vector.load %arg2[%c0_1, %c0_2] : memref<10x4xf32, #tpu.memory_space<vmem>>, vector<10x4xf32>
    %cst = arith.constant dense<0.000000e+00> : vector<10x128xf32>
    %2 = tpu.matmul %1, %0, %cst {dimension_numbers = #tpu.dot_dimension_numbers<[1], [0], [0], [1], [0, 0, 1, 1], [], []>} : vector<10x4xf32>, vector<4x128xf32>, vector<10x128xf32> -> vector<10x128xf32>
    %c0_3 = arith.constant 0 : index
    %c0_4 = arith.constant 0 : index
    %3 = vector.load %arg3[%c0_3, %c0_4] : memref<10x1xf32, #tpu.memory_space<vmem>>, vector<10x1xf32>
    %4 = vector.broadcast %3 : vector<10x1xf32> to vector<10x128xf32>
    %5 = arith.addf %2, %4 : vector<10x128xf32>
    %cst_5 = arith.constant 0.000000e+00 : f32
    %6 = vector.broadcast %cst_5 : f32 to vector<10x128xf32>
    %7 = arith.maximumf %5, %6 : vector<10x128xf32>
    %c0_6 = arith.constant 0 : index
    %c0_7 = arith.constant 0 : index
    %8 = vector.load %arg4[%c0_6, %c0_7] : memref<8x10xf32, #tpu.memory_space<vmem>>, vector<8x10xf32>
    %cst_8 = arith.constant dense<0.000000e+00> : vector<8x128xf32>
    %9 = tpu.matmul %8, %7, %cst_8 {dimension_numbers = #tpu.dot_dimension_numbers<[1], [0], [0], [1], [0, 0, 1, 1], [], []>} : vector<8x10xf32>, vector<10x128xf32>, vector<8x128xf32> -> vector<8x128xf32>
    %c0_9 = arith.constant 0 : index
    %c0_10 = arith.constant 0 : index
    %10 = vector.load %arg5[%c0_9, %c0_10] : memref<8x1xf32, #tpu.memory_space<vmem>>, vector<8x1xf32>
    %11 = vector.broadcast %10 : vector<8x1xf32> to vector<8x128xf32>
    %12 = arith.addf %9, %11 : vector<8x128xf32>
    %cst_11 = arith.constant 0.000000e+00 : f32
    %13 = vector.broadcast %cst_11 : f32 to vector<8x128xf32>
    %14 = arith.maximumf %12, %13 : vector<8x128xf32>
    %c0_12 = arith.constant 0 : index
    %c0_13 = arith.constant 0 : index
    %15 = vector.load %arg6[%c0_12, %c0_13] : memref<6x8xf32, #tpu.memory_space<vmem>>, vector<6x8xf32>
    %cst_14 = arith.constant dense<0.000000e+00> : vector<6x128xf32>
    %16 = tpu.matmul %15, %14, %cst_14 {dimension_numbers = #tpu.dot_dimension_numbers<[1], [0], [0], [1], [0, 0, 1, 1], [], []>} : vector<6x8xf32>, vector<8x128xf32>, vector<6x128xf32> -> vector<6x128xf32>
    %c0_15 = arith.constant 0 : index
    %c0_16 = arith.constant 0 : index
    %17 = vector.load %arg7[%c0_15, %c0_16] : memref<6x1xf32, #tpu.memory_space<vmem>>, vector<6x1xf32>
    %18 = vector.broadcast %17 : vector<6x1xf32> to vector<6x128xf32>
    %19 = arith.addf %16, %18 : vector<6x128xf32>
    %cst_17 = arith.constant 0.000000e+00 : f32
    %20 = vector.broadcast %cst_17 : f32 to vector<6x128xf32>
    %21 = arith.maximumf %19, %20 : vector<6x128xf32>
    %c0_18 = arith.constant 0 : index
    %c0_19 = arith.constant 0 : index
    %22 = vector.load %arg8[%c0_18, %c0_19] : memref<1x6xf32, #tpu.memory_space<vmem>>, vector<1x6xf32>
    %cst_20 = arith.constant dense<0.000000e+00> : vector<1x128xf32>
    %23 = tpu.matmul %22, %21, %cst_20 {dimension_numbers = #tpu.dot_dimension_numbers<[1], [0], [0], [1], [0, 0, 1, 1], [], []>} : vector<1x6xf32>, vector<6x128xf32>, vector<1x128xf32> -> vector<1x128xf32>
    %c0_21 = arith.constant 0 : index
    %c0_22 = arith.constant 0 : index
    %24 = vector.load %arg9[%c0_21, %c0_22] : memref<1x1xf32, #tpu.memory_space<vmem>>, vector<1x1xf32>
    %25 = vector.broadcast %24 : vector<1x1xf32> to vector<1x128xf32>
    %26 = arith.addf %23, %25 : vector<1x128xf32>
    %cst_23 = arith.constant 0.000000e+00 : f32
    %27 = vector.broadcast %cst_23 : f32 to vector<1x128xf32>
    %28 = arith.subf %27, %26 : vector<1x128xf32>
    %29 = math.exp %28 : vector<1x128xf32>
    %cst_24 = arith.constant 1.000000e+00 : f32
    %30 = vector.broadcast %cst_24 : f32 to vector<1x128xf32>
    %31 = arith.addf %30, %29 : vector<1x128xf32>
    %32 = tpu.reciprocal %31 {approx = true} : vector<1x128xf32> -> vector<1x128xf32>
    %c0_25 = arith.constant 0 : index
    %c0_26 = arith.constant 0 : index
    %33 = vector.load %arg10[%c0_25, %c0_26] : memref<1x128xf32, #tpu.memory_space<vmem>>, vector<1x128xf32>
    tpu.vector_store %arg10[%c0_25, %c0_26], %32 {strides = array<i32>} : memref<1x128xf32, #tpu.memory_space<vmem>>, vector<1x128xf32>,
    return
  }
  func.func @transform_0(%arg0: i32) -> (i32, i32) {
    %c0_i32 = arith.constant 0 : i32
    %c0_i32_0 = arith.constant 0 : i32
    return %c0_i32, %arg0 : i32, i32
  }
  func.func @transform_1(%arg0: i32) -> (i32, i32) {
    %c0_i32 = arith.constant 0 : i32
    %c0_i32_0 = arith.constant 0 : i32
    %c0_i32_1 = arith.constant 0 : i32
    return %c0_i32, %c0_i32_0 : i32, i32
  }
  func.func @transform_2(%arg0: i32) -> (i32, i32) {
    %c0_i32 = arith.constant 0 : i32
    %c0_i32_0 = arith.constant 0 : i32
    %c0_i32_1 = arith.constant 0 : i32
    return %c0_i32, %c0_i32_0 : i32, i32
  }
  func.func @transform_3(%arg0: i32) -> (i32, i32) {
    %c0_i32 = arith.constant 0 : i32
    %c0_i32_0 = arith.constant 0 : i32
    %c0_i32_1 = arith.constant 0 : i32
    return %c0_i32, %c0_i32_0 : i32, i32
  }
  func.func @transform_4(%arg0: i32) -> (i32, i32) {
    %c0_i32 = arith.constant 0 : i32
    %c0_i32_0 = arith.constant 0 : i32
    %c0_i32_1 = arith.constant 0 : i32
    return %c0_i32, %c0_i32_0 : i32, i32
  }
  func.func @transform_5(%arg0: i32) -> (i32, i32) {
    %c0_i32 = arith.constant 0 : i32
    %c0_i32_0 = arith.constant 0 : i32
    %c0_i32_1 = arith.constant 0 : i32
    return %c0_i32, %c0_i32_0 : i32, i32
  }
  func.func @transform_6(%arg0: i32) -> (i32, i32) {
    %c0_i32 = arith.constant 0 : i32
    %c0_i32_0 = arith.constant 0 : i32
    %c0_i32_1 = arith.constant 0 : i32
    return %c0_i32, %c0_i32_0 : i32, i32
  }
  func.func @transform_7(%arg0: i32) -> (i32, i32) {
    %c0_i32 = arith.constant 0 : i32
    %c0_i32_0 = arith.constant 0 : i32
    %c0_i32_1 = arith.constant 0 : i32
    return %c0_i32, %c0_i32_0 : i32, i32
  }
  func.func @transform_8(%arg0: i32) -> (i32, i32) {
    %c0_i32 = arith.constant 0 : i32
    %c0_i32_0 = arith.constant 0 : i32
    %c0_i32_1 = arith.constant 0 : i32
    return %c0_i32, %c0_i32_0 : i32, i32
  }
  func.func @transform_9(%arg0: i32) -> (i32, i32) {
    %c0_i32 = arith.constant 0 : i32
    %c0_i32_0 = arith.constant 0 : i32
    return %c0_i32, %arg0 : i32, i32
  }
}

</mosaic_0001>

<llo_original>
// kernel: tpu_custom_call.1
$region0: #{tpu_custom_call.1}
  #allocation0 [shape = 'u32[]', space=smem, size = 0x4, offset = 0x4, fixed_abs, tag = 'smem constant byte address 0x4 - core index']
  #allocation1 [shape = 'u32[144,128]{1,0:T(1,128)}', space=vmem, size = 0x12000, scoped, tag = 'internal scratch']
  #allocation2 [shape = 'f32[1,1]{1,0:T(1,128)S(1)}', space=vmem, size = 0x200, scoped, tag = 'scoped memory for tpu_custom_call.1']
  %s0 = inlined_call_operand.vmem [shape: f32[4,128], index: 0, kind: input, shape index: {}]
  %s1 = inlined_call_operand.vmem [shape: f32[10,4], index: 1, kind: input, shape index: {}]
  %s2 = inlined_call_operand.vmem [shape: f32[10,1], index: 2, kind: input, shape index: {}]
  %s3 = inlined_call_operand.vmem [shape: f32[8,10], index: 3, kind: input, shape index: {}]
  %s4 = inlined_call_operand.vmem [shape: f32[8,1], index: 4, kind: input, shape index: {}]
  %s5 = inlined_call_operand.vmem [shape: f32[6,8], index: 5, kind: input, shape index: {}]
  %s6 = inlined_call_operand.vmem [shape: f32[6,1], index: 6, kind: input, shape index: {}]
  %s7 = inlined_call_operand.vmem [shape: f32[1,6], index: 7, kind: input, shape index: {}]
  %s8 = inlined_call_operand.<no memory space> [shape: f32[1,1], index: 8, kind: input, shape index: {}]
  %s9 = inlined_call_operand.hbm [shape: f32[1,128], index: 9, kind: output, shape index: {}]
  %s10 = sld [smem:[#allocation0]]
  $region46: #{tpu_custom_call.1} parent=0
    _
  %s12 = ssub.s32 1, %s10
  %s13 = scalar_select 0, %s12, %s10
  %v14 = vstv %s8
  %15 = vst [vmem:[#allocation2] sm:$0x1] %v14
  $region1: #{tpu_custom_call.1} parent=0
    #allocation3 [shape = 'u8[512]{0}', space=vmem, size = 0x400, scoped, tag = 'output window, operand 0, single buffered']
    #allocation4 [shape = 's32[1]{0}', space=sflag, size = 0x4, scoped, tag = 'scoped memory for tpu_custom_call.1']
    %16 = vsyncpa [#allocation4], 0
    // Predicated region
    $region2: #{tpu_custom_call.1} parent=1 // pred_check
      _
    $region3: #{tpu_custom_call.1} parent=1 // pred_check_branch
      %18 = sbr.rel (0) target = $region5
    $region4: #{tpu_custom_call.1} parent=1 // pred_region
      _
    $region5: #{tpu_custom_call.1} parent=1 // pred_fallthru
      _
    // Predicated region
    $region6: #{tpu_custom_call.1} parent=1 // pred_check
      _
    $region7: #{tpu_custom_call.1} parent=1 // pred_check_branch
      %20 = sbr.rel (0) target = $region9
    $region8: #{tpu_custom_call.1} parent=1 // pred_region
      _
    $region9: #{tpu_custom_call.1} parent=1 // pred_fallthru
      _
    // Predicated region
    $region10: #{tpu_custom_call.1} parent=1 // pred_check
      _
    $region11: #{tpu_custom_call.1} parent=1 // pred_check_branch
      %22 = sbr.rel (0) target = $region13
    $region12: #{tpu_custom_call.1} parent=1 // pred_region
      _
    $region13: #{tpu_custom_call.1} parent=1 // pred_fallthru
      _
    // Predicated region
    $region14: #{tpu_custom_call.1} parent=1 // pred_check
      _
    $region15: #{tpu_custom_call.1} parent=1 // pred_check_branch
      %24 = sbr.rel (0) target = $region17
    $region16: #{tpu_custom_call.1} parent=1 // pred_region
      _
    $region17: #{tpu_custom_call.1} parent=1 // pred_fallthru
      _
    // Predicated region
    $region18: #{tpu_custom_call.1} parent=1 // pred_check
      _
    $region19: #{tpu_custom_call.1} parent=1 // pred_check_branch
      %26 = sbr.rel (0) target = $region21
    $region20: #{tpu_custom_call.1} parent=1 // pred_region
      _
    $region21: #{tpu_custom_call.1} parent=1 // pred_fallthru
      _
    // Predicated region
    $region22: #{tpu_custom_call.1} parent=1 // pred_check
      _
    $region23: #{tpu_custom_call.1} parent=1 // pred_check_branch
      %28 = sbr.rel (0) target = $region25
    $region24: #{tpu_custom_call.1} parent=1 // pred_region
      _
    $region25: #{tpu_custom_call.1} parent=1 // pred_fallthru
      _
    // Predicated region
    $region26: #{tpu_custom_call.1} parent=1 // pred_check
      _
    $region27: #{tpu_custom_call.1} parent=1 // pred_check_branch
      %30 = sbr.rel (0) target = $region29
    $region28: #{tpu_custom_call.1} parent=1 // pred_region
      _
    $region29: #{tpu_custom_call.1} parent=1 // pred_fallthru
      _
    // Predicated region
    $region30: #{tpu_custom_call.1} parent=1 // pred_check
      _
    $region31: #{tpu_custom_call.1} parent=1 // pred_check_branch
      %32 = sbr.rel (0) target = $region33
    $region32: #{tpu_custom_call.1} parent=1 // pred_region
      _
    $region33: #{tpu_custom_call.1} parent=1 // pred_fallthru
      _
    // Predicated region
    $region34: #{tpu_custom_call.1} parent=1 // pred_check
      _
    $region35: #{tpu_custom_call.1} parent=1 // pred_check_branch
      %34 = sbr.rel (0) target = $region37
    $region36: #{tpu_custom_call.1} parent=1 // pred_region
      _
    $region37: #{tpu_custom_call.1} parent=1 // pred_fallthru
      _
    %v35 = vld [vmem:[%s0] sm:$0xf]
    %v36 = vld [vmem:[%s1] sm:$0xff]
    %v37 = vld [vmem:[%s1 + $0x8] sm:$0x3]
    %v38 = vld [vmem:[%s2] sm:$0xff]
    %v39 = vld [vmem:[%s2 + $0x8] sm:$0x3]
    %41 = vset.pattern.permute.xlu0 0
    %42 = vperm.xlu0 %41, %v38
    %v43 = vpop.permute.xlu0 %42
    %46 = vset.pattern.permute.xlu0 0
    %47 = vperm.xlu0 %46, %v39
    %v48 = vpop.permute.xlu0 %47
    %vm50 = vcmask 31744
    %v52 = vsel %vm50, %v36, 0
    %v55 = vsel %vm50, %v37, 0
    %vm57 = vcmask 1043456
    %v59 = vsel %vm57, %v35, 0
    %61 = vmatprep.subr.mxu0 0.0
    %62 = vmatpush1.msra.mxu0 %v59
    %63 = vmatprep.subr.mxu0 0.0
    %64 = vmatpush1.msra.mxu0 0.0
    %65 = vmatprep.subr.mxu0 0.0
    %66 = vmatpush1.msra.mxu0 0.0
    %67 = vmatprep.subr.mxu0 0.0
    %68 = vmatpush1.msra.mxu0 0.0
    %69 = vmatprep.subr.mxu0 0.0
    %70 = vmatpush1.msra.mxu0 0.0
    %71 = vmatprep.subr.mxu0 0.0
    %72 = vmatpush1.msra.mxu0 0.0
    %73 = vmatprep.subr.mxu0 0.0
    %74 = vmatpush1.msra.mxu0 0.0
    %75 = vmatprep.subr.mxu0 0.0
    %76 = vmatpush1.msra.mxu0 0.0
    %77 = vmatprep.subr.mxu0 0.0
    %78 = vmatpush1.msra.mxu0 0.0
    %79 = vmatprep.subr.mxu0 0.0
    %80 = vmatpush1.msra.mxu0 0.0
    %81 = vmatprep.subr.mxu0 0.0
    %82 = vmatpush1.msra.mxu0 0.0
    %83 = vmatprep.subr.mxu0 0.0
    %84 = vmatpush1.msra.mxu0 0.0
    %85 = vmatprep.subr.mxu0 0.0
    %86 = vmatpush1.msra.mxu0 0.0
    %87 = vmatprep.subr.mxu0 0.0
    %88 = vmatpush1.msra.mxu0 0.0
    %89 = vmatprep.subr.mxu0 0.0
    %90 = vmatpush1.msra.mxu0 0.0
    %91 = vmatprep.subr.mxu0 0.0
    %92 = vmatpush1.msra.mxu0 0.0
    %93 = vmatprep.subr.mxu0 0.0
    %94 = vmatpush1.msra.mxu0 0.0
    %95 = vmatprep.subr.mxu0 0.0
    %96 = vmatpush1.msra.mxu0 0.0
    %97 = vmatprep.subr.mxu0 0.0
    %98 = vmatpush1.msra.mxu0 0.0
    %99 = vmatprep.subr.mxu0 0.0
    %100 = vmatpush1.msra.mxu0 0.0
    %101 = vmatprep.subr.mxu0 0.0
    %102 = vmatpush1.msra.mxu0 0.0
    %103 = vmatprep.subr.mxu0 0.0
    %104 = vmatpush1.msra.mxu0 0.0
    %105 = vmatprep.subr.mxu0 0.0
    %106 = vmatpush1.msra.mxu0 0.0
    %107 = vmatprep.subr.mxu0 0.0
    %108 = vmatpush1.msra.mxu0 0.0
    %109 = vmatprep.subr.mxu0 0.0
    %110 = vmatpush1.msra.mxu0 0.0
    %111 = vmatprep.subr.mxu0 0.0
    %112 = vmatpush1.msra.mxu0 0.0
    %113 = vmatprep.subr.mxu0 0.0
    %114 = vmatpush1.msra.mxu0 0.0
    %115 = vmatprep.subr.mxu0 0.0
    %116 = vmatpush1.msra.mxu0 0.0
    %117 = vmatprep.subr.mxu0 0.0
    %118 = vmatpush1.msra.mxu0 0.0
    %119 = vmatprep.subr.mxu0 0.0
    %120 = vmatpush1.msra.mxu0 0.0
    %121 = vmatprep.subr.mxu0 0.0
    %122 = vmatpush1.msra.mxu0 0.0
    %123 = vmatprep.subr.mxu0 0.0
    %124 = vmatpush1.msra.mxu0 0.0
    %125 = vmatprep.mubr.f32.mxu0 0.0
    %126 = vmatmul.mubr.f32.gmra.mrb[0].mxu0 %v52
    %v127 = vpop.f32.mrb[0].mxu0
    %v128 = vadd.f32 %v43, %v127
    %v129 = vpop.f32.mrb[0].mxu0
    %130 = vmatprep.mubr.f32.mxu0 0.0
    %131 = vmatmul.mubr.f32.gmra.mrb[0].mxu0 %v55
    %v132 = vpop.f32.mrb[0].mxu0
    %v133 = vadd.f32 %v48, %v132
    %v134 = vpop.f32.mrb[0].mxu0
    %135 = vdwg.mxu0
    %v136 = vmax.f32 %v128, 0.0
    %v137 = vmax.f32 %v133, 0.0
    %v138 = vld [vmem:[%s3] sm:$0xff]
    %v139 = vld [vmem:[%s4] sm:$0xff]
    %141 = vset.pattern.permute.xlu0 0
    %142 = vperm.xlu0 %141, %v139
    %v143 = vpop.permute.xlu0 %142
    %vm145 = vcmask 80896
    %v147 = vsel %vm145, %v138, 0
    %vm149 = vcmask 1041408
    %v151 = vsel %vm149, %v137, 0
    %153 = vmatprep.subr.mxu0 0.0
    %154 = vmatpush1.msra.mxu0 %v136
    %155 = vmatprep.subr.mxu0 0.0
    %156 = vmatpush1.msra.mxu0 %v151
    %157 = vmatprep.subr.mxu0 0.0
    %158 = vmatpush1.msra.mxu0 0.0
    %159 = vmatprep.subr.mxu0 0.0
    %160 = vmatpush1.msra.mxu0 0.0
    %161 = vmatprep.subr.mxu0 0.0
    %162 = vmatpush1.msra.mxu0 0.0
    %163 = vmatprep.subr.mxu0 0.0
    %164 = vmatpush1.msra.mxu0 0.0
    %165 = vmatprep.subr.mxu0 0.0
    %166 = vmatpush1.msra.mxu0 0.0
    %167 = vmatprep.subr.mxu0 0.0
    %168 = vmatpush1.msra.mxu0 0.0
    %169 = vmatprep.subr.mxu0 0.0
    %170 = vmatpush1.msra.mxu0 0.0
    %171 = vmatprep.subr.mxu0 0.0
    %172 = vmatpush1.msra.mxu0 0.0
    %173 = vmatprep.subr.mxu0 0.0
    %174 = vmatpush1.msra.mxu0 0.0
    %175 = vmatprep.subr.mxu0 0.0
    %176 = vmatpush1.msra.mxu0 0.0
    %177 = vmatprep.subr.mxu0 0.0
    %178 = vmatpush1.msra.mxu0 0.0
    %179 = vmatprep.subr.mxu0 0.0
    %180 = vmatpush1.msra.mxu0 0.0
    %181 = vmatprep.subr.mxu0 0.0
    %182 = vmatpush1.msra.mxu0 0.0
    %183 = vmatprep.subr.mxu0 0.0
    %184 = vmatpush1.msra.mxu0 0.0
    %185 = vmatprep.subr.mxu0 0.0
    %186 = vmatpush1.msra.mxu0 0.0
    %187 = vmatprep.subr.mxu0 0.0
    %188 = vmatpush1.msra.mxu0 0.0
    %189 = vmatprep.subr.mxu0 0.0
    %190 = vmatpush1.msra.mxu0 0.0
    %191 = vmatprep.subr.mxu0 0.0
    %192 = vmatpush1.msra.mxu0 0.0
    %193 = vmatprep.subr.mxu0 0.0
    %194 = vmatpush1.msra.mxu0 0.0
    %195 = vmatprep.subr.mxu0 0.0
    %196 = vmatpush1.msra.mxu0 0.0
    %197 = vmatprep.subr.mxu0 0.0
    %198 = vmatpush1.msra.mxu0 0.0
    %199 = vmatprep.subr.mxu0 0.0
    %200 = vmatpush1.msra.mxu0 0.0
    %201 = vmatprep.subr.mxu0 0.0
    %202 = vmatpush1.msra.mxu0 0.0
    %203 = vmatprep.subr.mxu0 0.0
    %204 = vmatpush1.msra.mxu0 0.0
    %205 = vmatprep.subr.mxu0 0.0
    %206 = vmatpush1.msra.mxu0 0.0
    %207 = vmatprep.subr.mxu0 0.0
    %208 = vmatpush1.msra.mxu0 0.0
    %209 = vmatprep.subr.mxu0 0.0
    %210 = vmatpush1.msra.mxu0 0.0
    %211 = vmatprep.subr.mxu0 0.0
    %212 = vmatpush1.msra.mxu0 0.0
    %213 = vmatprep.subr.mxu0 0.0
    %214 = vmatpush1.msra.mxu0 0.0
    %215 = vmatprep.subr.mxu0 0.0
    %216 = vmatpush1.msra.mxu0 0.0
    %217 = vmatprep.mubr.f32.mxu0 0.0
    %218 = vmatmul.mubr.f32.gmra.mrb[0].mxu0 %v147
    %v219 = vpop.f32.mrb[0].mxu0
    %v220 = vadd.f32 %v143, %v219
    %v221 = vpop.f32.mrb[0].mxu0
    %222 = vdwg.mxu0
    %v223 = vmax.f32 %v220, 0.0
    %v224 = vld [vmem:[%s5] sm:$0x3f]
    %v225 = vld [vmem:[%s6] sm:$0x3f]
    %227 = vset.pattern.permute.xlu0 0
    %228 = vperm.xlu0 %227, %v225
    %v229 = vpop.permute.xlu0 %228
    %vm231 = vcmask 64512
    %v233 = vsel %vm231, %v224, 0
    %235 = vmatprep.subr.mxu0 0.0
    %236 = vmatpush1.msra.mxu0 %v223
    %237 = vmatprep.subr.mxu0 0.0
    %238 = vmatpush1.msra.mxu0 0.0
    %239 = vmatprep.subr.mxu0 0.0
    %240 = vmatpush1.msra.mxu0 0.0
    %241 = vmatprep.subr.mxu0 0.0
    %242 = vmatpush1.msra.mxu0 0.0
    %243 = vmatprep.subr.mxu0 0.0
    %244 = vmatpush1.msra.mxu0 0.0
    %245 = vmatprep.subr.mxu0 0.0
    %246 = vmatpush1.msra.mxu0 0.0
    %247 = vmatprep.subr.mxu0 0.0
    %248 = vmatpush1.msra.mxu0 0.0
    %249 = vmatprep.subr.mxu0 0.0
    %250 = vmatpush1.msra.mxu0 0.0
    %251 = vmatprep.subr.mxu0 0.0
    %252 = vmatpush1.msra.mxu0 0.0
    %253 = vmatprep.subr.mxu0 0.0
    %254 = vmatpush1.msra.mxu0 0.0
    %255 = vmatprep.subr.mxu0 0.0
    %256 = vmatpush1.msra.mxu0 0.0
    %257 = vmatprep.subr.mxu0 0.0
    %258 = vmatpush1.msra.mxu0 0.0
    %259 = vmatprep.subr.mxu0 0.0
    %260 = vmatpush1.msra.mxu0 0.0
    %261 = vmatprep.subr.mxu0 0.0
    %262 = vmatpush1.msra.mxu0 0.0
    %263 = vmatprep.subr.mxu0 0.0
    %264 = vmatpush1.msra.mxu0 0.0
    %265 = vmatprep.subr.mxu0 0.0
    %266 = vmatpush1.msra.mxu0 0.0
    %267 = vmatprep.subr.mxu0 0.0
    %268 = vmatpush1.msra.mxu0 0.0
    %269 = vmatprep.subr.mxu0 0.0
    %270 = vmatpush1.msra.mxu0 0.0
    %271 = vmatprep.subr.mxu0 0.0
    %272 = vmatpush1.msra.mxu0 0.0
    %273 = vmatprep.subr.mxu0 0.0
    %274 = vmatpush1.msra.mxu0 0.0
    %275 = vmatprep.subr.mxu0 0.0
    %276 = vmatpush1.msra.mxu0 0.0
    %277 = vmatprep.subr.mxu0 0.0
    %278 = vmatpush1.msra.mxu0 0.0
    %279 = vmatprep.subr.mxu0 0.0
    %280 = vmatpush1.msra.mxu0 0.0
    %281 = vmatprep.subr.mxu0 0.0
    %282 = vmatpush1.msra.mxu0 0.0
    %283 = vmatprep.subr.mxu0 0.0
    %284 = vmatpush1.msra.mxu0 0.0
    %285 = vmatprep.subr.mxu0 0.0
    %286 = vmatpush1.msra.mxu0 0.0
    %287 = vmatprep.subr.mxu0 0.0
    %288 = vmatpush1.msra.mxu0 0.0
    %289 = vmatprep.subr.mxu0 0.0
    %290 = vmatpush1.msra.mxu0 0.0
    %291 = vmatprep.subr.mxu0 0.0
    %292 = vmatpush1.msra.mxu0 0.0
    %293 = vmatprep.subr.mxu0 0.0
    %294 = vmatpush1.msra.mxu0 0.0
    %295 = vmatprep.subr.mxu0 0.0
    %296 = vmatpush1.msra.mxu0 0.0
    %297 = vmatprep.subr.mxu0 0.0
    %298 = vmatpush1.msra.mxu0 0.0
    %299 = vmatprep.mubr.f32.mxu0 0.0
    %300 = vmatmul.mubr.f32.gmra.mrb[0].mxu0 %v233
    %v301 = vpop.f32.mrb[0].mxu0
    %v302 = vadd.f32 %v229, %v301
    %v303 = vpop.f32.mrb[0].mxu0
    %304 = vdwg.mxu0
    %v305 = vmax.f32 %v302, 0.0
    %v306 = vld [vmem:[%s7] sm:$0x1]
    %v307 = vld [vmem:[#allocation2] sm:$0x1]
    %309 = vset.pattern.permute.xlu0 0
    %310 = vperm.xlu0 %309, %v307
    %v311 = vpop.permute.xlu0 %310
    %v313 = vlaneseq
    %v314 = vshrl.u32 %v313, 7
    %v315 = vsub.s32 0, %v314
    %v316 = vrot.slane %v311, %v315
    %vm317 = vcmask 48128
    %v319 = vsel %vm317, %v306, 0
    %vm321 = vcmask 1045504
    %v323 = vsel %vm321, %v305, 0
    %325 = vmatprep.subr.mxu0 0.0
    %326 = vmatpush1.msra.mxu0 %v323
    %327 = vmatprep.subr.mxu0 0.0
    %328 = vmatpush1.msra.mxu0 0.0
    %329 = vmatprep.subr.mxu0 0.0
    %330 = vmatpush1.msra.mxu0 0.0
    %331 = vmatprep.subr.mxu0 0.0
    %332 = vmatpush1.msra.mxu0 0.0
    %333 = vmatprep.subr.mxu0 0.0
    %334 = vmatpush1.msra.mxu0 0.0
    %335 = vmatprep.subr.mxu0 0.0
    %336 = vmatpush1.msra.mxu0 0.0
    %337 = vmatprep.subr.mxu0 0.0
    %338 = vmatpush1.msra.mxu0 0.0
    %339 = vmatprep.subr.mxu0 0.0
    %340 = vmatpush1.msra.mxu0 0.0
    %341 = vmatprep.subr.mxu0 0.0
    %342 = vmatpush1.msra.mxu0 0.0
    %343 = vmatprep.subr.mxu0 0.0
    %344 = vmatpush1.msra.mxu0 0.0
    %345 = vmatprep.subr.mxu0 0.0
    %346 = vmatpush1.msra.mxu0 0.0
    %347 = vmatprep.subr.mxu0 0.0
    %348 = vmatpush1.msra.mxu0 0.0
    %349 = vmatprep.subr.mxu0 0.0
    %350 = vmatpush1.msra.mxu0 0.0
    %351 = vmatprep.subr.mxu0 0.0
    %352 = vmatpush1.msra.mxu0 0.0
    %353 = vmatprep.subr.mxu0 0.0
    %354 = vmatpush1.msra.mxu0 0.0
    %355 = vmatprep.subr.mxu0 0.0
    %356 = vmatpush1.msra.mxu0 0.0
    %357 = vmatprep.subr.mxu0 0.0
    %358 = vmatpush1.msra.mxu0 0.0
    %359 = vmatprep.subr.mxu0 0.0
    %360 = vmatpush1.msra.mxu0 0.0
    %361 = vmatprep.subr.mxu0 0.0
    %362 = vmatpush1.msra.mxu0 0.0
    %363 = vmatprep.subr.mxu0 0.0
    %364 = vmatpush1.msra.mxu0 0.0
    %365 = vmatprep.subr.mxu0 0.0
    %366 = vmatpush1.msra.mxu0 0.0
    %367 = vmatprep.subr.mxu0 0.0
    %368 = vmatpush1.msra.mxu0 0.0
    %369 = vmatprep.subr.mxu0 0.0
    %370 = vmatpush1.msra.mxu0 0.0
    %371 = vmatprep.subr.mxu0 0.0
    %372 = vmatpush1.msra.mxu0 0.0
    %373 = vmatprep.subr.mxu0 0.0
    %374 = vmatpush1.msra.mxu0 0.0
    %375 = vmatprep.subr.mxu0 0.0
    %376 = vmatpush1.msra.mxu0 0.0
    %377 = vmatprep.subr.mxu0 0.0
    %378 = vmatpush1.msra.mxu0 0.0
    %379 = vmatprep.subr.mxu0 0.0
    %380 = vmatpush1.msra.mxu0 0.0
    %381 = vmatprep.subr.mxu0 0.0
    %382 = vmatpush1.msra.mxu0 0.0
    %383 = vmatprep.subr.mxu0 0.0
    %384 = vmatpush1.msra.mxu0 0.0
    %385 = vmatprep.subr.mxu0 0.0
    %386 = vmatpush1.msra.mxu0 0.0
    %387 = vmatprep.subr.mxu0 0.0
    %388 = vmatpush1.msra.mxu0 0.0
    %389 = vmatprep.mubr.f32.mxu0 0.0
    %390 = vmatmul.mubr.f32.gmra.mrb[0].mxu0 %v319
    %v391 = vpop.f32.mrb[0].mxu0
    %v392 = vadd.f32 %v316, %v391
    %v393 = vpop.f32.mrb[0].mxu0
    %394 = vdwg.mxu0
    %v395 = vsub.f32 0.0, %v392
    %v396 = vmul.f32 %v395, 1.442695
    %v397 = vpow.pop %v396
    %v398 = vadd.f32 %v397, 1.0
    %v399 = vrcp.pop %v398
    %400 = vst [vmem:[#allocation3] sm:$0x1] %v399
    // Predicated region
    $region38: #{tpu_custom_call.1} parent=1 // pred_check
      _
    $region39: #{tpu_custom_call.1} parent=1 // pred_check_branch
      %402 = sbr.rel (0) target = $region41
    $region40: #{tpu_custom_call.1} parent=1 // pred_region
      %s404 = ssub.s32 16, 16
      %405 = vsyncadd [#allocation4], %s404
      %s407 = sshll.u32 [#allocation3], 4
      %s408 = int_to_ptr.vmem [resolvable:$true] %s407
      %410 = dma.vmem_to_hbm [thread:$0]  %s408, 16, %s9, [#allocation4]
    $region41: #{tpu_custom_call.1} parent=1 // pred_fallthru
      _
    // Predicated region
    $region42: #{tpu_custom_call.1} parent=1 // pred_check
      _
    $region43: #{tpu_custom_call.1} parent=1 // pred_check_branch
      %412 = sbr.rel (0) target = $region45
    $region44: #{tpu_custom_call.1} parent=1 // pred_region
      %413 = dma.done [#allocation4], 16
    $region45: #{tpu_custom_call.1} parent=1 // pred_fallthru
      _
    %414 = vsyncpa [#allocation4], 1

</llo_original>
